<compile_context>
chip_gen: v5e
topology: v5e:2x2
jax: 0.10.0
libtpu: 0.0.40
codegen_flags: <defaults>
</compile_context>

<pallas_src>
import functools

import jax
import jax.numpy as jnp
from jax import lax
from jax.experimental import pallas as pl
from jax.experimental.pallas import tpu as pltpu

_SUBLANE = 8     # f32 sublane multiple used for channel padding
_LANE = 128      # lane multiple used for sequence-length padding


def _round_up(n, m):
    return ((n + m - 1) // m) * m


# ----------------------------------------------------------------------------
# Kernel body
# ----------------------------------------------------------------------------
def _stack_causal_taps(x2d, kernel_size, dilation):
    """x2d: (C, L) f32 -> bf16 (K*C, L).

    Tap k occupies rows [k*C, (k+1)*C) and holds x shifted right by
    (K-1-k)*dilation lanes (causal conv with the chomp fused in: the prefix is
    zeroed, nothing past L is ever produced).  One wide MXU matmul against the
    pre-stacked (C_out, K*C) weights replaces K per-tap matmuls + K-1
    accumulator adds.  pltpu.roll rides the XLU slot and co-issues."""
    c, l = x2d.shape
    if kernel_size == 1:
        return x2d.astype(jnp.bfloat16)
    col = lax.broadcasted_iota(jnp.int32, (c, l), 1)   # hoisted: one iota per conv
    taps = []
    for k in range(kernel_size):
        shift = (kernel_size - 1 - k) * dilation
        if shift == 0:
            taps.append(x2d)                           # unshifted tap: no mask work
        elif shift >= l:
            taps.append(jnp.zeros_like(x2d))           # entirely in the causal zero region
        else:
            rolled = pltpu.roll(x2d, shift=shift, axis=1)
            taps.append(jnp.where(col >= shift, rolled, 0.0))
    return jnp.concatenate(taps, axis=0).astype(jnp.bfloat16)


def _temporal_block_kernel(*refs, kernel_size, dilation, has_downsample):
    """Fused TemporalBlock:
         h = relu(causal_conv1(x) + b1)                 (dropout = identity, eval)
         y = relu(relu(causal_conv2(h) + b2) + residual(x))
       One HBM read of x and one HBM write of y per block; h stays on-chip."""
    if has_downsample:
        x_ref, w1_ref, b1_ref, w2_ref, b2_ref, wd_ref, bd_ref, o_ref = refs
    else:
        x_ref, w1_ref, b1_ref, w2_ref, b2_ref, o_ref = refs
        wd_ref = bd_ref = None

    x = x_ref[0]                                            # (C_in_p, L_p) f32
    s1 = _stack_causal_taps(x, kernel_size, dilation)       # (K*C_in_p, L_p) bf16
    h = jnp.maximum(
        jnp.dot(w1_ref[...], s1, preferred_element_type=jnp.float32) + b1_ref[...],
        0.0)                                                # (C_out_p, L_p) f32

    s2 = _stack_causal_taps(h, kernel_size, dilation)       # (K*C_out_p, L_p) bf16
    out2 = jnp.maximum(
        jnp.dot(w2_ref[...], s2, preferred_element_type=jnp.float32) + b2_ref[...],
        0.0)

    if has_downsample:
        # NOTE: the 1x1 conv cannot be folded into the conv2 matmul because
        # PyTorch applies relu2 *before* adding the residual, so it stays a
        # separate (small) MXU dot.
        res = (jnp.dot(wd_ref[...], x.astype(jnp.bfloat16),
                       preferred_element_type=jnp.float32) + bd_ref[...])
    else:
        res = x
    o_ref[0] = jnp.maximum(out2 + res, 0.0).astype(o_ref.dtype)


# ----------------------------------------------------------------------------
# pallas_call wrapper
# ----------------------------------------------------------------------------
def _vmem_limit_bytes(block_bytes):
    # Double-buffered in/out blocks + in-kernel bf16/f32 temporaries, with
    # headroom.  For production tiles keep this <= ~48 MiB so it also fits
    # v7x's 64 MiB physical VMEM (v5e/v6e have 128 MiB).
    return int(min(max(6 * block_bytes + (4 << 20), 32 << 20), 100 << 20))


def temporal_block(x, layer):
    """x: (N, C_in_p, L_p) f32 -> (N, C_out_p, L_p) f32, one fused pallas_call."""
    n, c_in_p, l_p = x.shape
    w1, b1, w2, b2 = layer["w1"], layer["b1"], layer["w2"], layer["b2"]
    wd, bd = layer["wd"], layer["bd"]
    c_out_p = w1.shape[0]
    has_ds = wd is not None

    kern = functools.partial(_temporal_block_kernel,
                             kernel_size=layer["kernel_size"],
                             dilation=layer["dilation"],
                             has_downsample=has_ds)

    in_specs = [
        pl.BlockSpec((1, c_in_p, l_p), lambda i: (i, 0, 0)),       # x: per-batch block
        # weights/biases: constant index_map -> stay VMEM-resident across grid
        pl.BlockSpec(w1.shape, lambda i: (0, 0)),
        pl.BlockSpec(b1.shape, lambda i: (0, 0)),
        pl.BlockSpec(w2.shape, lambda i: (0, 0)),
        pl.BlockSpec(b2.shape, lambda i: (0, 0)),
    ]
    args = [x, w1, b1, w2, b2]
    if has_ds:
        in_specs += [pl.BlockSpec(wd.shape, lambda i: (0, 0)),
                     pl.BlockSpec(bd.shape, lambda i: (0, 0))]
        args += [wd, bd]

    block_bytes = (c_in_p + c_out_p) * l_p * 4                      # act blocks (f32)
    block_bytes += sum(a.size * a.dtype.itemsize for a in args[1:])  # weights/biases

    return pl.pallas_call(
        kern,
        out_shape=jax.ShapeDtypeStruct((n, c_out_p, l_p), x.dtype),
        grid_spec=pltpu.PrefetchScalarGridSpec(
            num_scalar_prefetch=0,
            grid=(n,),
            in_specs=in_specs,
            out_specs=pl.BlockSpec((1, c_out_p, l_p), lambda i: (i, 0, 0)),
        ),
        compiler_params=pltpu.CompilerParams(
            dimension_semantics=("parallel",),
            vmem_limit_bytes=_vmem_limit_bytes(block_bytes),
        ),
    )(*args)


# ----------------------------------------------------------------------------
# Parameters: init, one-time preprocessing (weight-norm fold + pad + stack)
# ----------------------------------------------------------------------------
def weight_norm(v, g):
    """PyTorch weight_norm (dim=0): w[o] = g[o] * v[o] / ||v[o]||_2."""
    norm = jnp.sqrt(jnp.sum(v * v, axis=tuple(range(1, v.ndim)), keepdims=True))
    return v * (g.reshape((-1,) + (1,) * (v.ndim - 1)) / norm)


def init_tcn_params(key, num_inputs, num_channels, kernel_size):
    params = []
    for i, c_out in enumerate(num_channels):
        c_in = num_inputs if i == 0 else num_channels[i - 1]
        key, k1, k2, k3, k4, k5, k6 = jax.random.split(key, 7)
        v1 = 0.01 * jax.random.normal(k1, (c_out, c_in, kernel_size), jnp.float32)
        v2 = 0.01 * jax.random.normal(k2, (c_out, c_out, kernel_size), jnp.float32)
        p = {
            "dilation": 2 ** i,
            "v1": v1, "g1": jnp.sqrt(jnp.sum(v1 * v1, axis=(1, 2))),
            "b1": 0.01 * jax.random.normal(k3, (c_out,), jnp.float32),
            "v2": v2, "g2": jnp.sqrt(jnp.sum(v2 * v2, axis=(1, 2))),
            "b2": 0.01 * jax.random.normal(k4, (c_out,), jnp.float32),
            "wd": None, "bd": None,
        }
        if c_in != c_out:
            p["wd"] = 0.01 * jax.random.normal(k5, (c_out, c_in), jnp.float32)
            p["bd"] = 0.01 * jax.random.normal(k6, (c_out,), jnp.float32)
        params.append(p)
    return params


def prepare_tcn_params(raw_params, num_inputs):
    """One-time preprocessing (run once, OUTSIDE the forward):
       fold weight_norm, zero-pad channels to multiples of 8 sublanes, reshape
       conv weights to the stacked (C_out_p, K*C_in_p) layout and cast the MXU
       operands to bf16 (biases stay f32).  Zero padding keeps the real
       channels/lanes bit-exact through the whole stack."""
    layers = []
    c_in = num_inputs
    for p in raw_params:
        c_out, _, ks = p["v1"].shape
        c_in_p = _round_up(c_in, _SUBLANE)
        c_out_p = _round_up(c_out, _SUBLANE)

        def stack(w, ci, ci_p):      # (c_out, ci, K) -> bf16 (c_out_p, K*ci_p)
            wp = jnp.zeros((c_out_p, ci_p, ks), jnp.float32).at[:c_out, :ci, :].set(w)
            return (jnp.transpose(wp, (0, 2, 1))
                    .reshape(c_out_p, ks * ci_p).astype(jnp.bfloat16))

        def pad_bias(b):
            return jnp.zeros((c_out_p, 1), jnp.float32).at[:c_out, 0].set(b)

        layer = {
            "kernel_size": ks,
            "dilation": p["dilation"],
            "w1": stack(weight_norm(p["v1"], p["g1"]), c_in, c_in_p),
            "b1": pad_bias(p["b1"]),
            "w2": stack(weight_norm(p["v2"], p["g2"]), c_out, c_out_p),
            "b2": pad_bias(p["b2"]),
            "wd": None, "bd": None,
        }
        if p["wd"] is not None:
            wd = jnp.zeros((c_out_p, c_in_p), jnp.float32).at[:c_out, :c_in].set(p["wd"])
            layer["wd"] = wd.astype(jnp.bfloat16)
            layer["bd"] = pad_bias(p["bd"])
        layers.append(layer)
        c_in = c_out
    return {"layers": layers,
            "c_in_pad": _round_up(num_inputs, _SUBLANE),
            "c_out_final": raw_params[-1]["v1"].shape[0]}


def tcn_forward(prepared, x):
    """Pallas forward: x (N, C_in, L) -> (N, num_channels[-1], L).
    Pads channels/length once, runs one fused pallas_call per TemporalBlock,
    strips the padding once at the end."""
    n, c_in, l = x.shape
    c_in_p = prepared["c_in_pad"]
    l_p = _round_up(l, _LANE)
    h = jnp.pad(x, ((0, 0), (0, c_in_p - c_in), (0, l_p - l)))
    for layer in prepared["layers"]:
        h = temporal_block(h, layer)
    return h[:, :prepared["c_out_final"], :l]


# ----------------------------------------------------------------------------
# Pure-JAX f32 reference (pad + slice formulation, independent of kernel path)
# ----------------------------------------------------------------------------
def _ref_causal_conv(x, w, b, dilation):
    n, c_in, l = x.shape
    c_out, _, k = w.shape
    pad = (k - 1) * dilation
    xp = jnp.pad(x, ((0, 0), (0, 0), (pad, 0)))
    out = jnp.zeros((n, c_out, l), jnp.float32)
    for kk in range(k):
        xs = xp[:, :, kk * dilation: kk * dilation + l]
        out = out + jnp.einsum("oi,nil->nol", w[:, :, kk], xs)
    return out + b[None, :, None]


def tcn_forward_ref(params, x):
    for p in params:
        d = p["dilation"]
        w1 = weight_norm(p["v1"], p["g1"])
        w2 = weight_norm(p["v2"], p["g2"])
        out1 = jax.nn.relu(_ref_causal_conv(x, w1, p["b1"], d))
        out2 = jax.nn.relu(_ref_causal_conv(out1, w2, p["b2"], d))
        if p["wd"] is None:
            res = x
        else:
            res = jnp.einsum("oi,nil->nol", p["wd"], x) + p["bd"][None, :, None]
        x = jax.nn.relu(out2 + res)
    return x


if __name__ == "__main__":
    key = jax.random.PRNGKey(0)
    batch, num_inputs, seq_len = 2, 4, 16
    num_channels = [8, 8]     # level 0: 4->8 (exercises 1x1 downsample), level 1: 8->8 (identity)
    kernel_size = 2

    key, kx = jax.random.split(key)
    x = jax.random.normal(kx, (batch, num_inputs, seq_len), dtype=jnp.float32)
    raw_params = init_tcn_params(key, num_inputs, num_channels, kernel_size)

    # One-time parameter preprocessing (weight-norm fold, pad, stack, bf16 cast).
    prepared = prepare_tcn_params(raw_params, num_inputs)

    out = tcn_forward(prepared, x)
    out = jax.block_until_ready(out)

    ref = tcn_forward_ref(raw_params, x)
    assert out.shape == (batch, num_channels[-1], seq_len)
    assert out.dtype == x.dtype
    err = float(jnp.max(jnp.abs(out - ref)))
    # bf16 MXU operands with f32 accumulation -> relaxed tolerance vs f32 ref.
    assert err < 1e-2, f"max abs err {err}"

    print("KERNEL_OK")
</pallas_src>

<mosaic_0001>
module attributes {stable_mosaic.version = 11 : i64} {
  func.func @_temporal_block_kernel(%arg0: i32, %arg1: memref<1x8x128xf32, #tpu.memory_space<vmem>>, %arg2: memref<8x16xbf16, #tpu.memory_space<vmem>>, %arg3: memref<8x1xf32, #tpu.memory_space<vmem>>, %arg4: memref<8x16xbf16, #tpu.memory_space<vmem>>, %arg5: memref<8x1xf32, #tpu.memory_space<vmem>>, %arg6: memref<8x8xbf16, #tpu.memory_space<vmem>>, %arg7: memref<8x1xf32, #tpu.memory_space<vmem>>, %arg8: memref<1x8x128xf32, #tpu.memory_space<vmem>>) attributes {dimension_semantics = [#tpu.dimension_semantics<parallel>], iteration_bounds = array<i64: 2>, scalar_prefetch = 0 : i64, scratch_operands = 0 : i64, tpu.core_type = #tpu.core_type<tc>, window_params = [{transform_indices = @transform_0, window_bounds = array<i64: 1, 8, 128>}, {pipeline_mode = #tpu.pipeline_mode<synchronous>, transform_indices = @transform_1, window_bounds = array<i64: 8, 16>}, {pipeline_mode = #tpu.pipeline_mode<synchronous>, transform_indices = @transform_2, window_bounds = array<i64: 8, 1>}, {pipeline_mode = #tpu.pipeline_mode<synchronous>, transform_indices = @transform_3, window_bounds = array<i64: 8, 16>}, {pipeline_mode = #tpu.pipeline_mode<synchronous>, transform_indices = @transform_4, window_bounds = array<i64: 8, 1>}, {pipeline_mode = #tpu.pipeline_mode<synchronous>, transform_indices = @transform_5, window_bounds = array<i64: 8, 8>}, {pipeline_mode = #tpu.pipeline_mode<synchronous>, transform_indices = @transform_6, window_bounds = array<i64: 8, 1>}, {transform_indices = @transform_7, window_bounds = array<i64: 1, 8, 128>}]} {
    %c0 = arith.constant 0 : index
    %c0_0 = arith.constant 0 : index
    %c0_1 = arith.constant 0 : index
    %0 = vector.load %arg1[%c0, %c0_0, %c0_1] : memref<1x8x128xf32, #tpu.memory_space<vmem>>, vector<1x8x128xf32>
    %1 = vector.shape_cast %0 : vector<1x8x128xf32> to vector<8x128xf32>
    %2 = tpu.iota {dimensions = array<i32: 1>} : vector<8x128xi32>
    %c1_i32 = arith.constant 1 : i32
    %3 = tpu.dynamic_rotate %1 by %c1_i32 dim 1 : vector<8x128xf32>, i32 -> vector<8x128xf32>
    %c1_i32_2 = arith.constant 1 : i32
    %4 = vector.broadcast %c1_i32_2 : i32 to vector<8x128xi32>
    %5 = arith.cmpi sge, %2, %4 : vector<8x128xi32>
    %cst = arith.constant 0.000000e+00 : f32
    %6 = vector.broadcast %cst : f32 to vector<8x128xf32>
    %7 = arith.select %5, %3, %6 : vector<8x128xi1>, vector<8x128xf32>
    %8 = tpu.concatenate %7, %1 in 0 : vector<8x128xf32>, vector<8x128xf32> -> vector<16x128xf32>
    %9 = arith.truncf %8 : vector<16x128xf32> to vector<16x128xbf16>
    %c0_3 = arith.constant 0 : index
    %c0_4 = arith.constant 0 : index
    %10 = vector.load %arg2[%c0_3, %c0_4] : memref<8x16xbf16, #tpu.memory_space<vmem>>, vector<8x16xbf16>
    %cst_5 = arith.constant dense<0.000000e+00> : vector<8x128xf32>
    %11 = tpu.matmul %10, %9, %cst_5 {dimension_numbers = #tpu.dot_dimension_numbers<[1], [0], [0], [1], [0, 0, 1, 1], [], []>} : vector<8x16xbf16>, vector<16x128xbf16>, vector<8x128xf32> -> vector<8x128xf32>
    %c0_6 = arith.constant 0 : index
    %c0_7 = arith.constant 0 : index
    %12 = vector.load %arg3[%c0_6, %c0_7] : memref<8x1xf32, #tpu.memory_space<vmem>>, vector<8x1xf32>
    %13 = vector.broadcast %12 : vector<8x1xf32> to vector<8x128xf32>
    %14 = arith.addf %11, %13 : vector<8x128xf32>
    %cst_8 = arith.constant 0.000000e+00 : f32
    %15 = vector.broadcast %cst_8 : f32 to vector<8x128xf32>
    %16 = arith.maximumf %14, %15 : vector<8x128xf32>
    %17 = tpu.iota {dimensions = array<i32: 1>} : vector<8x128xi32>
    %c1_i32_9 = arith.constant 1 : i32
    %18 = tpu.dynamic_rotate %16 by %c1_i32_9 dim 1 : vector<8x128xf32>, i32 -> vector<8x128xf32>
    %c1_i32_10 = arith.constant 1 : i32
    %19 = vector.broadcast %c1_i32_10 : i32 to vector<8x128xi32>
    %20 = arith.cmpi sge, %17, %19 : vector<8x128xi32>
    %cst_11 = arith.constant 0.000000e+00 : f32
    %21 = vector.broadcast %cst_11 : f32 to vector<8x128xf32>
    %22 = arith.select %20, %18, %21 : vector<8x128xi1>, vector<8x128xf32>
    %23 = tpu.concatenate %22, %16 in 0 : vector<8x128xf32>, vector<8x128xf32> -> vector<16x128xf32>
    %24 = arith.truncf %23 : vector<16x128xf32> to vector<16x128xbf16>
    %c0_12 = arith.constant 0 : index
    %c0_13 = arith.constant 0 : index
    %25 = vector.load %arg4[%c0_12, %c0_13] : memref<8x16xbf16, #tpu.memory_space<vmem>>, vector<8x16xbf16>
    %cst_14 = arith.constant dense<0.000000e+00> : vector<8x128xf32>
    %26 = tpu.matmul %25, %24, %cst_14 {dimension_numbers = #tpu.dot_dimension_numbers<[1], [0], [0], [1], [0, 0, 1, 1], [], []>} : vector<8x16xbf16>, vector<16x128xbf16>, vector<8x128xf32> -> vector<8x128xf32>
    %c0_15 = arith.constant 0 : index
    %c0_16 = arith.constant 0 : index
    %27 = vector.load %arg5[%c0_15, %c0_16] : memref<8x1xf32, #tpu.memory_space<vmem>>, vector<8x1xf32>
    %28 = vector.broadcast %27 : vector<8x1xf32> to vector<8x128xf32>
    %29 = arith.addf %26, %28 : vector<8x128xf32>
    %cst_17 = arith.constant 0.000000e+00 : f32
    %30 = vector.broadcast %cst_17 : f32 to vector<8x128xf32>
    %31 = arith.maximumf %29, %30 : vector<8x128xf32>
    %c0_18 = arith.constant 0 : index
    %c0_19 = arith.constant 0 : index
    %32 = vector.load %arg6[%c0_18, %c0_19] : memref<8x8xbf16, #tpu.memory_space<vmem>>, vector<8x8xbf16>
    %33 = arith.truncf %1 : vector<8x128xf32> to vector<8x128xbf16>
    %cst_20 = arith.constant dense<0.000000e+00> : vector<8x128xf32>
    %34 = tpu.matmul %32, %33, %cst_20 {dimension_numbers = #tpu.dot_dimension_numbers<[1], [0], [0], [1], [0, 0, 1, 1], [], []>} : vector<8x8xbf16>, vector<8x128xbf16>, vector<8x128xf32> -> vector<8x128xf32>
    %c0_21 = arith.constant 0 : index
    %c0_22 = arith.constant 0 : index
    %35 = vector.load %arg7[%c0_21, %c0_22] : memref<8x1xf32, #tpu.memory_space<vmem>>, vector<8x1xf32>
    %36 = vector.broadcast %35 : vector<8x1xf32> to vector<8x128xf32>
    %37 = arith.addf %34, %36 : vector<8x128xf32>
    %38 = arith.addf %31, %37 : vector<8x128xf32>
    %cst_23 = arith.constant 0.000000e+00 : f32
    %39 = vector.broadcast %cst_23 : f32 to vector<8x128xf32>
    %40 = arith.maximumf %38, %39 : vector<8x128xf32>
    %c0_24 = arith.constant 0 : index
    %c0_25 = arith.constant 0 : index
    %c0_26 = arith.constant 0 : index
    %41 = vector.load %arg8[%c0_24, %c0_25, %c0_26] : memref<1x8x128xf32, #tpu.memory_space<vmem>>, vector<1x8x128xf32>
    %42 = vector.shape_cast %41 : vector<1x8x128xf32> to vector<8x128xf32>
    %43 = vector.shape_cast %40 : vector<8x128xf32> to vector<1x8x128xf32>
    tpu.vector_store %arg8[%c0_24, %c0_25, %c0_26], %43 {strides = array<i32>} : memref<1x8x128xf32, #tpu.memory_space<vmem>>, vector<1x8x128xf32>,
    return
  }
  func.func @transform_0(%arg0: i32) -> (i32, i32, i32) {
    %c0_i32 = arith.constant 0 : i32
    %c0_i32_0 = arith.constant 0 : i32
    %c0_i32_1 = arith.constant 0 : i32
    return %arg0, %c0_i32, %c0_i32_0 : i32, i32, i32
  }
  func.func @transform_1(%arg0: i32) -> (i32, i32) {
    %c0_i32 = arith.constant 0 : i32
    %c0_i32_0 = arith.constant 0 : i32
    %c0_i32_1 = arith.constant 0 : i32
    return %c0_i32, %c0_i32_0 : i32, i32
  }
  func.func @transform_2(%arg0: i32) -> (i32, i32) {
    %c0_i32 = arith.constant 0 : i32
    %c0_i32_0 = arith.constant 0 : i32
    %c0_i32_1 = arith.constant 0 : i32
    return %c0_i32, %c0_i32_0 : i32, i32
  }
  func.func @transform_3(%arg0: i32) -> (i32, i32) {
    %c0_i32 = arith.constant 0 : i32
    %c0_i32_0 = arith.constant 0 : i32
    %c0_i32_1 = arith.constant 0 : i32
    return %c0_i32, %c0_i32_0 : i32, i32
  }
  func.func @transform_4(%arg0: i32) -> (i32, i32) {
    %c0_i32 = arith.constant 0 : i32
    %c0_i32_0 = arith.constant 0 : i32
    %c0_i32_1 = arith.constant 0 : i32
    return %c0_i32, %c0_i32_0 : i32, i32
  }
  func.func @transform_5(%arg0: i32) -> (i32, i32) {
    %c0_i32 = arith.constant 0 : i32
    %c0_i32_0 = arith.constant 0 : i32
    %c0_i32_1 = arith.constant 0 : i32
    return %c0_i32, %c0_i32_0 : i32, i32
  }
  func.func @transform_6(%arg0: i32) -> (i32, i32) {
    %c0_i32 = arith.constant 0 : i32
    %c0_i32_0 = arith.constant 0 : i32
    %c0_i32_1 = arith.constant 0 : i32
    return %c0_i32, %c0_i32_0 : i32, i32
  }
  func.func @transform_7(%arg0: i32) -> (i32, i32, i32) {
    %c0_i32 = arith.constant 0 : i32
    %c0_i32_0 = arith.constant 0 : i32
    %c0_i32_1 = arith.constant 0 : i32
    return %arg0, %c0_i32, %c0_i32_0 : i32, i32, i32
  }
}

</mosaic_0001>

<llo_original>
// kernel: tpu_custom_call.1
$region0: #{tpu_custom_call.1}
  #allocation0 [shape = 'u32[]', space=smem, size = 0x4, offset = 0x4, fixed_abs, tag = 'smem constant byte address 0x4 - core index']
  #allocation1 [shape = 'u32[72,128]{1,0:T(1,128)}', space=vmem, size = 0x9000, scoped, tag = 'internal scratch']
  %s0 = inlined_call_operand.vmem [shape: f32[2,8,128], index: 0, kind: input, shape index: {}]
  %s1 = inlined_call_operand.vmem [shape: bf16[8,16], index: 1, kind: input, shape index: {}]
  %s2 = inlined_call_operand.vmem [shape: f32[8,1], index: 2, kind: input, shape index: {}]
  %s3 = inlined_call_operand.vmem [shape: bf16[8,16], index: 3, kind: input, shape index: {}]
  %s4 = inlined_call_operand.vmem [shape: f32[8,1], index: 4, kind: input, shape index: {}]
  %s5 = inlined_call_operand.hbm [shape: bf16[8,8], index: 5, kind: input, shape index: {}]
  %s6 = inlined_call_operand.vmem [shape: f32[8,1], index: 6, kind: input, shape index: {}]
  %s7 = inlined_call_operand.hbm [shape: f32[2,8,128], index: 7, kind: output, shape index: {}]
  %s8 = sld [smem:[#allocation0]]
  $region65: #{tpu_custom_call.1} parent=0
    _
  %s10 = ssub.s32 1, %s8
  %s11 = scalar_select 0, %s10, %s8
  $region1: #{tpu_custom_call.1} parent=0
    #allocation2 [shape = 'u8[2048]{0}', space=vmem, size = 0x800, scoped, tag = 'input window, operand 5, single buffered']
    #allocation3 [shape = 's32[2]{0}', space=sflag, size = 0x8, scoped, tag = 'scoped memory for tpu_custom_call.1']
    #allocation4 [shape = 's32[2]{0}', space=sflag, size = 0x8, scoped, tag = 'scoped memory for tpu_custom_call.1']
    #allocation5 [shape = 'u8[8192]{0}', space=vmem, size = 0x2000, scoped, tag = 'output window, operand 0']
    %12 = vsyncpa [#allocation3], 0
    %13 = vsyncpa [#allocation4], 0
    %s14 = scalar_lea.sflag [#allocation4], 1
    %15 = vsyncpa %s14, 0
    loop: start=0, step=1, limit=4
    $region2: #{tpu_custom_call.1} parent=1 // loop_pre_header
      _
    $region3: #{tpu_custom_call.1} parent=1 // loop_header
      %s17 = sphi 0, %s21
      %p18 = scmp.ge.s32.totalorder %s17, 4
      %s27 = sphi 0, %s29
      %s30 = sphi 0, %s27
      %s31 = sphi 0, %s30
      %s47 = sphi 0, %s31
      %s51 = sphi 0, %s51
      %s53 = sphi 0, %s51
      %s54 = sphi 0, %s53
      %s68 = sphi 0, %s54
      %s72 = sphi 0, %s72
      %s74 = sphi 0, %s72
      %s75 = sphi 0, %s74
      %s89 = sphi 0, %s75
      %s93 = sphi 0, %s93
      %s95 = sphi 0, %s93
      %s96 = sphi 0, %s95
      %s110 = sphi 0, %s96
      %s114 = sphi 0, %s114
      %s116 = sphi 0, %s114
      %s117 = sphi 0, %s116
      %s131 = sphi 0, %s117
      %s135 = sphi 0, %s135
      %s137 = sphi 0, %s135
      %s138 = sphi 0, %s137
      %s152 = sphi 0, %s138
      %s156 = sphi 0, %s156
      %s158 = sphi 0, %s156
      %s159 = sphi 0, %s158
      %s173 = sphi 0, %s159
      %s179 = sphi 0, %s181
      %s182 = sphi 0, %s179
      %s183 = sphi 0, %s182
      %s199 = sphi 0, %s183
    $region4: #{tpu_custom_call.1} parent=1 // loop_header_branch
      %20 = sbr.rel (%p18) target = $region8
    $region5: #{tpu_custom_call.1} parent=1 // loop_body
      %s22 = ssub.s32 %s17, 1
      %s23 = ssub.s32 %s17, 2
      %s24 = sadd.s32 %s17, 1
      %s25 = ssub.s32 %s17, %s24
      %p26 = scmp.eq.s32.totalorder %s25, 0
      %s28 = sadd.s32 %s27, 1
      %s29 = scalar_select %p26, %s27, %s28
      %p32 = pneg %p26
      %p33 = scmp.eq.s32.totalorder %s17, 1
      %p34 = por %p32, %p33
      %p35 = scmp.ne.s32.totalorder %s27, %s30
      %p36 = scmp.eq.s32.totalorder %s17, 0
      %p37 = por %p35, %p36
      %p38 = scmp.ne.s32.totalorder %s27, %s30
      %p39 = scmp.eq.s32.totalorder %s22, 1
      %p40 = por %p38, %p39
      %p41 = scmp.ne.s32.totalorder %s30, %s31
      %p42 = scmp.eq.s32.totalorder %s22, 0
      %p43 = por %p41, %p42
      %p44 = scmp.ne.s32.totalorder %s30, %s31
      %p45 = scmp.eq.s32.totalorder %s23, 1
      %p46 = por %p44, %p45
      %p48 = scmp.ne.s32.totalorder %s31, %s47
      %p49 = scmp.eq.s32.totalorder %s23, 0
      %p50 = por %p48, %p49
      %s52 = sadd.s32 %s51, 1
      %p55 = scmp.eq.s32.totalorder %s17, 1
      %p56 = scmp.ne.s32.totalorder %s51, %s53
      %p57 = scmp.eq.s32.totalorder %s17, 0
      %p58 = por %p56, %p57
      %p59 = scmp.ne.s32.totalorder %s51, %s53
      %p60 = scmp.eq.s32.totalorder %s22, 1
      %p61 = por %p59, %p60
      %p62 = scmp.ne.s32.totalorder %s53, %s54
      %p63 = scmp.eq.s32.totalorder %s22, 0
      %p64 = por %p62, %p63
      %p65 = scmp.ne.s32.totalorder %s53, %s54
      %p66 = scmp.eq.s32.totalorder %s23, 1
      %p67 = por %p65, %p66
      %p69 = scmp.ne.s32.totalorder %s54, %s68
      %p70 = scmp.eq.s32.totalorder %s23, 0
      %p71 = por %p69, %p70
      %s73 = sadd.s32 %s72, 1
      %p76 = scmp.eq.s32.totalorder %s17, 1
      %p77 = scmp.ne.s32.totalorder %s72, %s74
      %p78 = scmp.eq.s32.totalorder %s17, 0
      %p79 = por %p77, %p78
      %p80 = scmp.ne.s32.totalorder %s72, %s74
      %p81 = scmp.eq.s32.totalorder %s22, 1
      %p82 = por %p80, %p81
      %p83 = scmp.ne.s32.totalorder %s74, %s75
      %p84 = scmp.eq.s32.totalorder %s22, 0
      %p85 = por %p83, %p84
      %p86 = scmp.ne.s32.totalorder %s74, %s75
      %p87 = scmp.eq.s32.totalorder %s23, 1
      %p88 = por %p86, %p87
      %p90 = scmp.ne.s32.totalorder %s75, %s89
      %p91 = scmp.eq.s32.totalorder %s23, 0
      %p92 = por %p90, %p91
      %s94 = sadd.s32 %s93, 1
      %p97 = scmp.eq.s32.totalorder %s17, 1
      %p98 = scmp.ne.s32.totalorder %s93, %s95
      %p99 = scmp.eq.s32.totalorder %s17, 0
      %p100 = por %p98, %p99
      %p101 = scmp.ne.s32.totalorder %s93, %s95
      %p102 = scmp.eq.s32.totalorder %s22, 1
      %p103 = por %p101, %p102
      %p104 = scmp.ne.s32.totalorder %s95, %s96
      %p105 = scmp.eq.s32.totalorder %s22, 0
      %p106 = por %p104, %p105
      %p107 = scmp.ne.s32.totalorder %s95, %s96
      %p108 = scmp.eq.s32.totalorder %s23, 1
      %p109 = por %p107, %p108
      %p111 = scmp.ne.s32.totalorder %s96, %s110
      %p112 = scmp.eq.s32.totalorder %s23, 0
      %p113 = por %p111, %p112
      %s115 = sadd.s32 %s114, 1
      %p118 = scmp.eq.s32.totalorder %s17, 1
      %p119 = scmp.ne.s32.totalorder %s114, %s116
      %p120 = scmp.eq.s32.totalorder %s17, 0
      %p121 = por %p119, %p120
      %p122 = scmp.ne.s32.totalorder %s114, %s116
      %p123 = scmp.eq.s32.totalorder %s22, 1
      %p124 = por %p122, %p123
      %p125 = scmp.ne.s32.totalorder %s116, %s117
      %p126 = scmp.eq.s32.totalorder %s22, 0
      %p127 = por %p125, %p126
      %p128 = scmp.ne.s32.totalorder %s116, %s117
      %p129 = scmp.eq.s32.totalorder %s23, 1
      %p130 = por %p128, %p129
      %p132 = scmp.ne.s32.totalorder %s117, %s131
      %p133 = scmp.eq.s32.totalorder %s23, 0
      %p134 = por %p132, %p133
      %s136 = sadd.s32 %s135, 1
      %p139 = scmp.eq.s32.totalorder %s17, 1
      %p140 = scmp.ne.s32.totalorder %s135, %s137
      %p141 = scmp.eq.s32.totalorder %s17, 0
      %p142 = por %p140, %p141
      %p143 = scmp.ne.s32.totalorder %s135, %s137
      %p144 = scmp.eq.s32.totalorder %s22, 1
      %p145 = por %p143, %p144
      %p146 = scmp.ne.s32.totalorder %s137, %s138
      %p147 = scmp.eq.s32.totalorder %s22, 0
      %p148 = por %p146, %p147
      %p149 = scmp.ne.s32.totalorder %s137, %s138
      %p150 = scmp.eq.s32.totalorder %s23, 1
      %p151 = por %p149, %p150
      %p153 = scmp.ne.s32.totalorder %s138, %s152
      %p154 = scmp.eq.s32.totalorder %s23, 0
      %p155 = por %p153, %p154
      %s157 = sadd.s32 %s156, 1
      %p160 = scmp.eq.s32.totalorder %s17, 1
      %p161 = scmp.ne.s32.totalorder %s156, %s158
      %p162 = scmp.eq.s32.totalorder %s17, 0
      %p163 = por %p161, %p162
      %p164 = scmp.ne.s32.totalorder %s156, %s158
      %p165 = scmp.eq.s32.totalorder %s22, 1
      %p166 = por %p164, %p165
      %p167 = scmp.ne.s32.totalorder %s158, %s159
      %p168 = scmp.eq.s32.totalorder %s22, 0
      %p169 = por %p167, %p168
      %p170 = scmp.ne.s32.totalorder %s158, %s159
      %p171 = scmp.eq.s32.totalorder %s23, 1
      %p172 = por %p170, %p171
      %p174 = scmp.ne.s32.totalorder %s159, %s173
      %p175 = scmp.eq.s32.totalorder %s23, 0
      %p176 = por %p174, %p175
      %s177 = ssub.s32 %s17, %s24
      %p178 = scmp.eq.s32.totalorder %s177, 0
      %s180 = sadd.s32 %s179, 1
      %s181 = scalar_select %p178, %s179, %s180
      %p184 = pneg %p178
      %p185 = scmp.eq.s32.totalorder %s17, 1
      %p186 = por %p184, %p185
      %p187 = scmp.ne.s32.totalorder %s179, %s182
      %p188 = scmp.eq.s32.totalorder %s17, 0
      %p189 = por %p187, %p188
      %p190 = scmp.ne.s32.totalorder %s179, %s182
      %p191 = scmp.eq.s32.totalorder %s22, 1
      %p192 = por %p190, %p191
      %p193 = scmp.ne.s32.totalorder %s182, %s183
      %p194 = scmp.eq.s32.totalorder %s22, 0
      %p195 = por %p193, %p194
      %p196 = scmp.ne.s32.totalorder %s182, %s183
      %p197 = scmp.eq.s32.totalorder %s23, 1
      %p198 = por %p196, %p197
      %p200 = scmp.ne.s32.totalorder %s183, %s199
      %p201 = scmp.eq.s32.totalorder %s23, 0
      %p202 = por %p200, %p201
      %p203 = scmp.le.s32.totalorder 1, %s17
      %p204 = scmp.lt.s32.totalorder %s17, 3
      %p205 = pnand %p203, %p204
      %p206 = pneg %p205
      // Predicated region
      $region9: #{tpu_custom_call.1} parent=5 // pred_check
        _
      $region10: #{tpu_custom_call.1} parent=5 // pred_check_branch
        %208 = sbr.rel (%p205) target = $region12
      $region11: #{tpu_custom_call.1} parent=5 // pred_region
        %s209 = ssub.s32 %s17, 1
        // Predicated region
        $region13: #{tpu_custom_call.1} parent=11 // pred_check
          %p210 = pneg %p64
        $region14: #{tpu_custom_call.1} parent=11 // pred_check_branch
          %212 = sbr.rel (%p210) target = $region16
        $region15: #{tpu_custom_call.1} parent=11 // pred_region
          _
        $region16: #{tpu_custom_call.1} parent=11 // pred_fallthru
          _
        // Predicated region
        $region17: #{tpu_custom_call.1} parent=11 // pred_check
          %p213 = pneg %p85
        $region18: #{tpu_custom_call.1} parent=11 // pred_check_branch
          %215 = sbr.rel (%p213) target = $region20
        $region19: #{tpu_custom_call.1} parent=11 // pred_region
          _
        $region20: #{tpu_custom_call.1} parent=11 // pred_fallthru
          _
        // Predicated region
        $region21: #{tpu_custom_call.1} parent=11 // pred_check
          %p216 = pneg %p106
        $region22: #{tpu_custom_call.1} parent=11 // pred_check_branch
          %218 = sbr.rel (%p216) target = $region24
        $region23: #{tpu_custom_call.1} parent=11 // pred_region
          _
        $region24: #{tpu_custom_call.1} parent=11 // pred_fallthru
          _
        // Predicated region
        $region25: #{tpu_custom_call.1} parent=11 // pred_check
          %p219 = pneg %p127
        $region26: #{tpu_custom_call.1} parent=11 // pred_check_branch
          %221 = sbr.rel (%p219) target = $region28
        $region27: #{tpu_custom_call.1} parent=11 // pred_region
          _
        $region28: #{tpu_custom_call.1} parent=11 // pred_fallthru
          _
        // Predicated region
        $region29: #{tpu_custom_call.1} parent=11 // pred_check
          %p222 = pneg %p148
        $region30: #{tpu_custom_call.1} parent=11 // pred_check_branch
          %224 = sbr.rel (%p222) target = $region32
        $region31: #{tpu_custom_call.1} parent=11 // pred_region
          %226 = vsyncadd [#allocation3], 0
          %s228 = sshll.u32 %s5, 4
          %s229 = int_to_ptr.hbm [resolvable:$true] %s228
          %s230 = sshll.u32 [#allocation2], 4
          %s231 = int_to_ptr.vmem [resolvable:$true] %s230
          %233 = dma.hbm_to_vmem [thread:$0]  %s229, 64, %s231, [#allocation3]
        $region32: #{tpu_custom_call.1} parent=11 // pred_fallthru
          _
        // Predicated region
        $region33: #{tpu_custom_call.1} parent=11 // pred_check
          %p234 = pneg %p169
        $region34: #{tpu_custom_call.1} parent=11 // pred_check_branch
          %236 = sbr.rel (%p234) target = $region36
        $region35: #{tpu_custom_call.1} parent=11 // pred_region
          _
        $region36: #{tpu_custom_call.1} parent=11 // pred_fallthru
          _
      $region12: #{tpu_custom_call.1} parent=5 // pred_fallthru
        _
      %p237 = scmp.lt.s32.totalorder %s17, 2
      // Predicated region
      $region37: #{tpu_custom_call.1} parent=5 // pred_check
        %p238 = pneg %p237
      $region38: #{tpu_custom_call.1} parent=5 // pred_check_branch
        %240 = sbr.rel (%p238) target = $region40
      $region39: #{tpu_custom_call.1} parent=5 // pred_region
        // Predicated region
        $region41: #{tpu_custom_call.1} parent=39 // pred_check
          %p241 = pneg %p37
        $region42: #{tpu_custom_call.1} parent=39 // pred_check_branch
          %243 = sbr.rel (%p241) target = $region44
        $region43: #{tpu_custom_call.1} parent=39 // pred_region
          %p244 = scmp.lt.s32.totalorder %s17, 1
          %s245 = scalar_select %p244, %s17, 1
          %s246 = smul.addr %s245, 8
          %s247 = scalar_lea.vmem %s0, %s246
        $region44: #{tpu_custom_call.1} parent=39 // pred_fallthru
          _
      $region40: #{tpu_custom_call.1} parent=5 // pred_fallthru
        _
      %p248 = scmp.le.s32.totalorder 1, %s17
      %p249 = scmp.lt.s32.totalorder %s17, 3
      %p250 = pnand %p248, %p249
      %p251 = pneg %p250
      // Predicated region
      $region45: #{tpu_custom_call.1} parent=5 // pred_check
        _
      $region46: #{tpu_custom_call.1} parent=5 // pred_check_branch
        %253 = sbr.rel (%p250) target = $region48
      $region47: #{tpu_custom_call.1} parent=5 // pred_region
        %s254 = ssub.s32 %s17, 1
        // Predicated region
        $region49: #{tpu_custom_call.1} parent=47 // pred_check
          %p255 = pneg %p148
        $region50: #{tpu_custom_call.1} parent=47 // pred_check_branch
          %257 = sbr.rel (%p255) target = $region52
        $region51: #{tpu_custom_call.1} parent=47 // pred_region
          %259 = dma.done [#allocation3], 64
        $region52: #{tpu_custom_call.1} parent=47 // pred_fallthru
          _
        %p260 = scmp.lt.s32.totalorder %s22, 1
        %s261 = scalar_select %p260, %s22, 1
        %s262 = smul.addr %s261, 8
        %s263 = scalar_lea.vmem %s0, %s262
        %p264 = pneg %p43
        %p265 = pneg %p40
        %p266 = pneg %p64
        %p267 = pneg %p61
        %p268 = pneg %p85
        %p269 = pneg %p82
        %p270 = pneg %p106
        %p271 = pneg %p103
        %p272 = pneg %p127
        %p273 = pneg %p124
        %p274 = pneg %p148
        %p275 = pneg %p145
        %p276 = pneg %p169
        %p277 = pneg %p166
        %p278 = pneg %p195
        %p279 = pneg %p192
        %s280 = sand.u32 %s182, 1
        %s281 = scalar_lea.sflag [#allocation4], %s280
        %s282 = sand.u32 %s182, 1
        %s283 = smul.addr %s282, 8
        %s284 = scalar_lea.vmem [#allocation5], %s283
        %p285 = scmp.lt.s32.totalorder %s22, 1
        %s286 = scalar_select %p285, %s22, 1
        %s287 = smul.addr %s286, 8
        %s288 = scalar_lea.vmem %s0, %s287
        %v290 = vld [vmem:[%s288] sm:$0xff]
        %v291 = vlaneseq
        %v292 = vand.u32 %v291, 127
        %293 = vrot.lane.b32.xlu0 %v290, 1
        %v294 = vpop.permute.xlu0 %293
        %vm295 = vcmp.ge.s32.totalorder %v292, 1
        %v296 = vsel %vm295, %v294, 0.0
        %v297 = vpack.c.bf16 %v290, %v296
        %v298 = vld [vmem:[%s1] sm:$0xf]
        %v299 = vld [vmem:[%s2] sm:$0xff]
        %301 = vset.pattern.permute.xlu0 0
        %302 = vperm.xlu0 %301, %v299
        %v303 = vpop.permute.xlu0 %302
        %vm305 = vcmask 130048
        %v307 = vsel %vm305, %v298, 0
        %309 = vmatpush.bf16.msra.mxu0 0
        %310 = vmatpush.bf16.msra.mxu0 0
        %311 = vmatpush.bf16.msra.mxu0 0
        %312 = vmatpush.bf16.msra.mxu0 0
        %313 = vmatpush.bf16.msra.mxu0 0
        %314 = vmatpush.bf16.msra.mxu0 0
        %315 = vmatpush.bf16.msra.mxu0 0
        %316 = vmatpush.bf16.msra.mxu0 %v297
        %317 = vmatmul.bf16.gmra.mxu0 %v307
        %v318 = vpop.f32.mrf.mxu0
        %v319 = vadd.f32 %v303, %v318
        %v320 = vpop.f32.mrf.mxu0
        %321 = vdwg.mxu0
        %v322 = vmax.f32 %v319, 0.0
        %323 = vrot.lane.b32.xlu0 %v322, 1
        %v324 = vpop.permute.xlu0 %323
        %v325 = vsel %vm295, %v324, 0.0
        %v326 = vpack.c.bf16 %v322, %v325
        %v327 = vld [vmem:[%s3] sm:$0xf]
        %v328 = vld [vmem:[%s4] sm:$0xff]
        %330 = vset.pattern.permute.xlu0 0
        %331 = vperm.xlu0 %330, %v328
        %v332 = vpop.permute.xlu0 %331
        %v335 = vsel %vm305, %v327, 0
        %337 = vmatpush.bf16.msra.mxu0 0
        %338 = vmatpush.bf16.msra.mxu0 0
        %339 = vmatpush.bf16.msra.mxu0 0
        %340 = vmatpush.bf16.msra.mxu0 0
        %341 = vmatpush.bf16.msra.mxu0 0
        %342 = vmatpush.bf16.msra.mxu0 0
        %343 = vmatpush.bf16.msra.mxu0 0
        %344 = vmatpush.bf16.msra.mxu0 %v326
        %345 = vmatmul.bf16.gmra.mxu0 %v335
        %v346 = vpop.f32.mrf.mxu0
        %v347 = vadd.f32 %v332, %v346
        %v348 = vpop.f32.mrf.mxu0
        %349 = vdwg.mxu0
        %v350 = vmax.f32 %v347, 0.0
        %v351 = vld [vmem:[#allocation2] sm:$0xf]
        %v352 = vpack.c.bf16 %v290, %v290
        %v353 = vld [vmem:[%s6] sm:$0xff]
        %355 = vset.pattern.permute.xlu0 0
        %356 = vperm.xlu0 %355, %v353
        %v357 = vpop.permute.xlu0 %356
        %vm359 = vcmask 64512
        %v361 = vsel %vm359, %v351, 0
        %vm363 = vcmask 1043456
        %v365 = vsel %vm363, %v352, 0
        %367 = vmatpush.bf16.msra.mxu0 0
        %368 = vmatpush.bf16.msra.mxu0 0
        %369 = vmatpush.bf16.msra.mxu0 0
        %370 = vmatpush.bf16.msra.mxu0 0
        %371 = vmatpush.bf16.msra.mxu0 0
        %372 = vmatpush.bf16.msra.mxu0 0
        %373 = vmatpush.bf16.msra.mxu0 0
        %374 = vmatpush.bf16.msra.mxu0 %v365
        %375 = vmatmul.bf16.gmra.mxu0 %v361
        %v376 = vpop.f32.mrf.mxu0
        %v377 = vadd.f32 %v357, %v376
        %v378 = vpop.f32.mrf.mxu0
        %379 = vdwg.mxu0
        %v380 = vadd.f32 %v350, %v377
        %v381 = vmax.f32 %v380, 0.0
        %382 = vst [vmem:[%s284] sm:$0xff] %v381
        %s383 = sand.u32 %s182, 1
        %s384 = scalar_lea.sflag [#allocation4], %s383
        %s385 = sand.u32 %s182, 1
        %s386 = smul.addr %s385, 8
        %s387 = scalar_lea.vmem [#allocation5], %s386
        // Predicated region
        $region53: #{tpu_custom_call.1} parent=47 // pred_check
          %p388 = pneg %p192
        $region54: #{tpu_custom_call.1} parent=47 // pred_check_branch
          %390 = sbr.rel (%p388) target = $region56
        $region55: #{tpu_custom_call.1} parent=47 // pred_region
          %392 = vsyncadd %s384, 0
          %s393 = smul.addr %s22, 8
          %s394 = scalar_lea.hbm %s7, %s393
          %s396 = sshll.u32 %s387, 4
          %s397 = int_to_ptr.vmem [resolvable:$true] %s396
          %s398 = sshll.u32 %s394, 4
          %s399 = int_to_ptr.hbm [resolvable:$true] %s398
          %401 = dma.vmem_to_hbm [thread:$0]  %s397, 128, %s399, %s384
        $region56: #{tpu_custom_call.1} parent=47 // pred_fallthru
          _
      $region48: #{tpu_custom_call.1} parent=5 // pred_fallthru
        _
      %p402 = scmp.le.s32.totalorder 2, %s17
      // Predicated region
      $region57: #{tpu_custom_call.1} parent=5 // pred_check
        %p403 = pneg %p402
      $region58: #{tpu_custom_call.1} parent=5 // pred_check_branch
        %405 = sbr.rel (%p403) target = $region60
      $region59: #{tpu_custom_call.1} parent=5 // pred_region
        %s406 = ssub.s32 %s17, 2
        // Predicated region
        $region61: #{tpu_custom_call.1} parent=59 // pred_check
          %p407 = pneg %p198
        $region62: #{tpu_custom_call.1} parent=59 // pred_check_branch
          %409 = sbr.rel (%p407) target = $region64
        $region63: #{tpu_custom_call.1} parent=59 // pred_region
          %s410 = sand.u32 %s183, 1
          %s411 = scalar_lea.sflag [#allocation4], %s410
          %s412 = sand.u32 %s183, 1
          %s413 = smul.addr %s412, 8
          %s414 = scalar_lea.vmem [#allocation5], %s413
          %416 = dma.done %s411, 128
        $region64: #{tpu_custom_call.1} parent=59 // pred_fallthru
          _
      $region60: #{tpu_custom_call.1} parent=5 // pred_fallthru
        _
    $region6: #{tpu_custom_call.1} parent=1 // loop_footer
      %s21 = sadd.s32 1, %s17
    $region7: #{tpu_custom_call.1} parent=1 // loop_footer_branch
      %16 = sbr.rel target = $region3
    $region8: #{tpu_custom_call.1} parent=1 // loop_exit
      _
    %417 = vsyncpa [#allocation3], 1
    %s418 = scalar_lea.sflag [#allocation3], 1
    %419 = vsyncpa %s418, 1
    %420 = vsyncpa [#allocation4], 1
    %s421 = scalar_lea.sflag [#allocation4], 1
    %422 = vsyncpa %s421, 1

</llo_original>
